<compile_context>
chip_gen: v7x
topology: tpu7x:2x2x1
jax: 0.10.0
libtpu: 0.0.40
codegen_flags: <defaults>
</compile_context>

<pallas_src>
from functools import partial
from typing import NamedTuple

import jax
import jax.numpy as jnp
from jax.experimental import pallas as pl
from jax.experimental.pallas import tpu as pltpu


_SQRT_2_OVER_PI = 0.7978845608028654
_GELU_C3 = 0.044715 * _SQRT_2_OVER_PI


def _gelu_new(x):
    # HF "gelu_new" (tanh approximation), f32.  x2 computed once; constants folded.
    x2 = x * x
    return 0.5 * x * (1.0 + jnp.tanh(x * (_SQRT_2_OVER_PI + _GELU_C3 * x2)))


def _round_up(x, m):
    return ((x + m - 1) // m) * m


def _pick_inner_tile(total, max_tile):
    """Largest multiple of 128 that divides `total` (a multiple of 128) and is
    <= max_tile."""
    n = total // 128
    best = 1
    for d in range(1, n + 1):
        if n % d == 0 and d * 128 <= max_tile:
            best = d
    return best * 128


def _vmem_budget_bytes(frac=0.85):
    """Per-core VMEM budget: fraction of physical capacity (v5e/v6e: 128 MiB,
    v7x: 64 MiB per TC).  Falls back to the v7x size if the query fails."""
    cap = 64 * 1024 * 1024
    try:
        info = pltpu.get_tpu_info()
        cap = int(getattr(info, "vmem_capacity_bytes", cap))
    except Exception:
        pass
    return int(cap * frac)


class GPT2MLPParams(NamedTuple):
    wfc: jax.Array    # (Hp, Ip) bf16 : c_fc.weight.T, zero-padded
    bfc: jax.Array    # (1, Ip)  f32
    wproj: jax.Array  # (Ip, Hp) bf16 : c_proj.weight.T, zero-padded
    bproj: jax.Array  # (1, Hp)  f32
    hidden: int       # H (unpadded)
    inter: int        # I (unpadded)


def prepare_gpt2_mlp_params(w_fc, b_fc, w_proj, b_proj):
    """One-time parameter prep (load time, not per forward call): transpose the
    PyTorch nn.Linear layout to matmul layout, cast to bf16, zero-pad to
    lane-friendly multiples of 128.

    PyTorch layout in: w_fc:(I,H), b_fc:(I,), w_proj:(H,I), b_proj:(H,).
    Zero padding is exact: padded I columns have zero weight + zero bias and
    gelu_new(0) == 0; padded H columns are sliced off after the kernel.
    """
    I, H = w_fc.shape
    assert w_proj.shape == (H, I) and b_fc.shape == (I,) and b_proj.shape == (H,)
    Hp = _round_up(H, 128)
    Ip = _round_up(I, 128)

    wfc_t = jnp.pad(w_fc.T.astype(jnp.bfloat16), ((0, Hp - H), (0, Ip - I)))
    wproj_t = jnp.pad(w_proj.T.astype(jnp.bfloat16), ((0, Ip - I), (0, Hp - H)))
    bfc2 = jnp.pad(b_fc.astype(jnp.float32), (0, Ip - I)).reshape(1, Ip)
    bproj2 = jnp.pad(b_proj.astype(jnp.float32), (0, Hp - H)).reshape(1, Hp)
    return GPT2MLPParams(wfc_t, bfc2, wproj_t, bproj2, H, I)


# --------------------------- resident-weights path ---------------------------

def _mlp_resident_kernel(x_ref, wfc_ref, bfc_ref, wproj_ref, bproj_ref, o_ref,
                         *, ti, n_inner):
    # x_ref:(tm,Hp) input dtype   wfc_ref:(Hp,Ip) bf16 (whole, VMEM-resident)
    # bfc_ref:(1,Ip) f32          wproj_ref:(Ip,Hp) bf16   bproj_ref:(1,Hp) f32
    # o_ref:(tm,Hp)
    x = x_ref[...].astype(jnp.bfloat16)          # cast in-kernel (no wrapper pass)
    acc = jnp.zeros(o_ref.shape, jnp.float32)
    for l in range(n_inner):                      # short static unroll over I chunks
        j = l * ti
        h = jnp.dot(x, wfc_ref[:, j:j + ti], preferred_element_type=jnp.float32)
        h = _gelu_new(h + bfc_ref[:, j:j + ti])
        acc = acc + jnp.dot(h.astype(jnp.bfloat16), wproj_ref[j:j + ti, :],
                            preferred_element_type=jnp.float32)
    # bproj added once; dropout is identity in eval mode.
    o_ref[...] = (acc + bproj_ref[...]).astype(o_ref.dtype)


# ----------------------------- streaming fallback ----------------------------

def _mlp_stream_kernel(x_ref, wfc_ref, bfc_ref, wproj_ref, bproj_ref, o_ref,
                       acc_ref):
    # x_ref:(tm,Hp)   wfc_ref:(Hp,ti) bf16   bfc_ref:(1,ti) f32
    # wproj_ref:(ti,Hp) bf16   bproj_ref:(1,Hp) f32   acc_ref:(tm,Hp) f32
    k = pl.program_id(1)

    @pl.when(k == 0)
    def _init():
        acc_ref[...] = jnp.zeros_like(acc_ref)

    x = x_ref[...].astype(jnp.bfloat16)
    h = jnp.dot(x, wfc_ref[...], preferred_element_type=jnp.float32)
    h = _gelu_new(h + bfc_ref[...])
    acc_ref[...] += jnp.dot(h.astype(jnp.bfloat16), wproj_ref[...],
                            preferred_element_type=jnp.float32)

    @pl.when(k == pl.num_programs(1) - 1)
    def _finalize():
        o_ref[...] = (acc_ref[...] + bproj_ref[...]).astype(o_ref.dtype)


# ---------------------------------- wrapper ----------------------------------

def ime_gpt2_mlp(hidden_states, params: GPT2MLPParams, *, tm=512):
    """hidden_states: (B, S, H); params from prepare_gpt2_mlp_params."""
    B, S, H = hidden_states.shape
    assert H == params.hidden
    Hp, Ip = params.wfc.shape
    in_dtype = hidden_states.dtype
    out_dtype = hidden_states.dtype
    xb = jnp.dtype(in_dtype).itemsize
    ob = jnp.dtype(out_dtype).itemsize

    M = B * S
    # Clamp tm to the actual M (short sequences / decode steps don't pad up).
    tm = min(_round_up(tm, 8), _round_up(M, 8))
    Mp = _round_up(M, tm)

    x2d = hidden_states.reshape(M, H)
    padded = (Mp, Hp) != (M, H)
    if padded:
        x2d = jnp.pad(x2d, ((0, Mp - M), (0, Hp - H)))

    budget = _vmem_budget_bytes()
    n_m = Mp // tm
    flops = 4 * Mp * Hp * Ip  # two matmuls

    # ---- resident-weights fast path: weights fetched from HBM exactly once ----
    ti_res = _pick_inner_tile(Ip, 2048)
    weight_vmem = 2 * Hp * Ip * 2 + (Ip + Hp) * 4
    working_vmem = (2 * tm * Hp * xb        # x tiles (double-buffered)
                    + 2 * tm * Hp * ob      # out tiles (double-buffered)
                    + tm * Hp * 4           # f32 accumulator value
                    + 3 * tm * ti_res * 4   # live intermediates (h f32 + bf16)
                    + (4 << 20))            # compiler scratch margin
    use_resident = (weight_vmem + working_vmem) <= budget

    if use_resident:
        bytes_accessed = (Mp * Hp * xb + 2 * Hp * Ip * 2 + (Ip + Hp) * 4
                          + Mp * Hp * ob)
        out2d = pl.pallas_call(
            partial(_mlp_resident_kernel, ti=ti_res, n_inner=Ip // ti_res),
            out_shape=jax.ShapeDtypeStruct((Mp, Hp), out_dtype),
            grid_spec=pltpu.PrefetchScalarGridSpec(
                num_scalar_prefetch=0,
                grid=(n_m,),
                in_specs=[
                    pl.BlockSpec((tm, Hp), lambda i: (i, 0)),          # x tile
                    pl.BlockSpec(memory_space=pltpu.MemorySpace.VMEM),  # Wfc^T (whole)
                    pl.BlockSpec(memory_space=pltpu.MemorySpace.VMEM),  # bfc
                    pl.BlockSpec(memory_space=pltpu.MemorySpace.VMEM),  # Wproj^T (whole)
                    pl.BlockSpec(memory_space=pltpu.MemorySpace.VMEM),  # bproj
                ],
                out_specs=pl.BlockSpec((tm, Hp), lambda i: (i, 0)),
            ),
            compiler_params=pltpu.CompilerParams(
                dimension_semantics=("parallel",),
                vmem_limit_bytes=budget,
            ),
            cost_estimate=pl.CostEstimate(
                flops=flops, transcendentals=Mp * Ip,
                bytes_accessed=bytes_accessed),
        )(x2d, params.wfc, params.bfc, params.wproj, params.bproj)
    else:
        # ---- streaming fallback (weights too big for VMEM residency) ----
        ti = _pick_inner_tile(Ip, 1024)
        vmem_needed = (2 * tm * Hp * xb
                       + 3 * (Hp * ti + ti * Hp) * 2   # Buffered(3) weight slices
                       + 2 * tm * Hp * ob
                       + tm * Hp * 4                   # acc scratch
                       + 2 * (ti + Hp) * 4             # biases
                       + 3 * tm * ti * 4)              # live intermediates
        vmem_limit = int(min(max(int(vmem_needed * 1.25), 32 << 20), budget))
        # Weights are re-streamed once per M tile -> account for it honestly.
        bytes_accessed = (Mp * Hp * xb
                          + n_m * 2 * Hp * Ip * 2
                          + n_m * (Ip + Hp) * 4
                          + Mp * Hp * ob)
        out2d = pl.pallas_call(
            _mlp_stream_kernel,
            out_shape=jax.ShapeDtypeStruct((Mp, Hp), out_dtype),
            grid_spec=pltpu.PrefetchScalarGridSpec(
                num_scalar_prefetch=0,
                grid=(n_m, Ip // ti),
                in_specs=[
                    pl.BlockSpec((tm, Hp), lambda i, k: (i, 0)),   # x tile (resident over k)
                    pl.BlockSpec((Hp, ti), lambda i, k: (0, k),
                                 pipeline_mode=pl.Buffered(3)),    # Wfc^T slice
                    pl.BlockSpec((1, ti), lambda i, k: (0, k)),    # bfc slice
                    pl.BlockSpec((ti, Hp), lambda i, k: (k, 0),
                                 pipeline_mode=pl.Buffered(3)),    # Wproj^T slice
                    pl.BlockSpec((1, Hp), lambda i, k: (0, 0)),    # bproj
                ],
                out_specs=pl.BlockSpec((tm, Hp), lambda i, k: (i, 0)),
                scratch_shapes=[pltpu.VMEM((tm, Hp), jnp.float32)],
            ),
            compiler_params=pltpu.CompilerParams(
                dimension_semantics=("parallel", "arbitrary"),
                vmem_limit_bytes=vmem_limit,
            ),
            cost_estimate=pl.CostEstimate(
                flops=flops, transcendentals=Mp * Ip,
                bytes_accessed=bytes_accessed),
        )(x2d, params.wfc, params.bfc, params.wproj, params.bproj)

    if padded:
        out2d = out2d[:M, :H]
    return out2d.reshape(B, S, H)


if __name__ == "__main__":
    # Small GPT2-like config: hidden_size=32, intermediate_size=128.
    B, S, H, I = 2, 8, 32, 128

    key = jax.random.PRNGKey(0)
    k_x, k_wfc, k_bfc, k_wproj, k_bproj = jax.random.split(key, 5)

    x = jax.random.normal(k_x, (B, S, H), dtype=jnp.float32)
    # PyTorch nn.Linear layout: (out_features, in_features).
    w_fc = jax.random.normal(k_wfc, (I, H), dtype=jnp.float32) * 0.02
    b_fc = jax.random.normal(k_bfc, (I,), dtype=jnp.float32) * 0.02
    w_proj = jax.random.normal(k_wproj, (H, I), dtype=jnp.float32) * 0.02
    b_proj = jax.random.normal(k_bproj, (H,), dtype=jnp.float32) * 0.02

    # One-time layout prep (transpose + bf16 cast + pad) outside the hot path.
    params = prepare_gpt2_mlp_params(w_fc, b_fc, w_proj, b_proj)

    out = ime_gpt2_mlp(x, params)
    out = jax.block_until_ready(out)

    # Reference with matched numerics (bf16 MXU operands, f32 accumulation).
    def ref(xv):
        xb = xv.astype(jnp.bfloat16)
        wfc_b = w_fc.T.astype(jnp.bfloat16)
        wproj_b = w_proj.T.astype(jnp.bfloat16)
        h = jnp.dot(xb, wfc_b, preferred_element_type=jnp.float32) + b_fc
        h = 0.5 * h * (1.0 + jnp.tanh(_SQRT_2_OVER_PI * (h + 0.044715 * h ** 3)))
        return jnp.dot(h.astype(jnp.bfloat16), wproj_b,
                       preferred_element_type=jnp.float32) + b_proj

    expected = ref(x)
    assert out.shape == (B, S, H)
    assert jnp.allclose(out, expected, atol=2e-3, rtol=2e-2), "mismatch vs reference"

    print("KERNEL_OK")
</pallas_src>

<mosaic_0001>
module attributes {stable_mosaic.version = 11 : i64} {
  func.func @_mlp_resident_kernel(%arg0: i32, %arg1: memref<16x128xf32, #tpu.memory_space<vmem>>, %arg2: memref<128x128xbf16, #tpu.memory_space<vmem>>, %arg3: memref<1x128xf32, #tpu.memory_space<vmem>>, %arg4: memref<128x128xbf16, #tpu.memory_space<vmem>>, %arg5: memref<1x128xf32, #tpu.memory_space<vmem>>, %arg6: memref<16x128xf32, #tpu.memory_space<vmem>>) attributes {dimension_semantics = [#tpu.dimension_semantics<parallel>], iteration_bounds = array<i64: 1>, scalar_prefetch = 0 : i64, scratch_operands = 0 : i64, tpu.core_type = #tpu.core_type<tc>, window_params = [{transform_indices = @transform_0, window_bounds = array<i64: 16, 128>}, {pipeline_mode = #tpu.pipeline_mode<synchronous>, transform_indices = @transform_1, window_bounds = array<i64: 128, 128>}, {pipeline_mode = #tpu.pipeline_mode<synchronous>, transform_indices = @transform_2, window_bounds = array<i64: 1, 128>}, {pipeline_mode = #tpu.pipeline_mode<synchronous>, transform_indices = @transform_3, window_bounds = array<i64: 128, 128>}, {pipeline_mode = #tpu.pipeline_mode<synchronous>, transform_indices = @transform_4, window_bounds = array<i64: 1, 128>}, {transform_indices = @transform_5, window_bounds = array<i64: 16, 128>}]} {
    %c0 = arith.constant 0 : index
    %c0_0 = arith.constant 0 : index
    %0 = vector.load %arg1[%c0, %c0_0] : memref<16x128xf32, #tpu.memory_space<vmem>>, vector<16x128xf32>
    %1 = arith.truncf %0 : vector<16x128xf32> to vector<16x128xbf16>
    %cst = arith.constant 0.000000e+00 : f32
    %2 = vector.broadcast %cst : f32 to vector<16x128xf32>
    %c0_1 = arith.constant 0 : index
    %c0_2 = arith.constant 0 : index
    %3 = vector.load %arg2[%c0_1, %c0_2] : memref<128x128xbf16, #tpu.memory_space<vmem>>, vector<128x128xbf16>
    %cst_3 = arith.constant dense<0.000000e+00> : vector<16x128xf32>
    %4 = tpu.matmul %1, %3, %cst_3 {dimension_numbers = #tpu.dot_dimension_numbers<[1], [0], [0], [1], [0, 0, 1, 1], [], []>} : vector<16x128xbf16>, vector<128x128xbf16>, vector<16x128xf32> -> vector<16x128xf32>
    %c0_4 = arith.constant 0 : index
    %c0_5 = arith.constant 0 : index
    %5 = vector.load %arg3[%c0_4, %c0_5] : memref<1x128xf32, #tpu.memory_space<vmem>>, vector<1x128xf32>
    %6 = vector.broadcast %5 : vector<1x128xf32> to vector<16x128xf32>
    %7 = arith.addf %4, %6 : vector<16x128xf32>
    %8 = arith.mulf %7, %7 : vector<16x128xf32>
    %cst_6 = arith.constant 5.000000e-01 : f32
    %9 = vector.broadcast %cst_6 : f32 to vector<16x128xf32>
    %10 = arith.mulf %9, %7 : vector<16x128xf32>
    %cst_7 = arith.constant 0.0356774069 : f32
    %11 = vector.broadcast %cst_7 : f32 to vector<16x128xf32>
    %12 = arith.mulf %11, %8 : vector<16x128xf32>
    %cst_8 = arith.constant 0.797884583 : f32
    %13 = vector.broadcast %cst_8 : f32 to vector<16x128xf32>
    %14 = arith.addf %13, %12 : vector<16x128xf32>
    %15 = arith.mulf %7, %14 : vector<16x128xf32>
    %16 = math.tanh %15 : vector<16x128xf32>
    %cst_9 = arith.constant 1.000000e+00 : f32
    %17 = vector.broadcast %cst_9 : f32 to vector<16x128xf32>
    %18 = arith.addf %17, %16 : vector<16x128xf32>
    %19 = arith.mulf %10, %18 : vector<16x128xf32>
    %20 = arith.truncf %19 : vector<16x128xf32> to vector<16x128xbf16>
    %c0_10 = arith.constant 0 : index
    %c0_11 = arith.constant 0 : index
    %21 = vector.load %arg4[%c0_10, %c0_11] : memref<128x128xbf16, #tpu.memory_space<vmem>>, vector<128x128xbf16>
    %cst_12 = arith.constant dense<0.000000e+00> : vector<16x128xf32>
    %22 = tpu.matmul %20, %21, %cst_12 {dimension_numbers = #tpu.dot_dimension_numbers<[1], [0], [0], [1], [0, 0, 1, 1], [], []>} : vector<16x128xbf16>, vector<128x128xbf16>, vector<16x128xf32> -> vector<16x128xf32>
    %23 = arith.addf %2, %22 : vector<16x128xf32>
    %c0_13 = arith.constant 0 : index
    %c0_14 = arith.constant 0 : index
    %24 = vector.load %arg5[%c0_13, %c0_14] : memref<1x128xf32, #tpu.memory_space<vmem>>, vector<1x128xf32>
    %25 = vector.broadcast %24 : vector<1x128xf32> to vector<16x128xf32>
    %26 = arith.addf %23, %25 : vector<16x128xf32>
    %c0_15 = arith.constant 0 : index
    %c0_16 = arith.constant 0 : index
    %27 = vector.load %arg6[%c0_15, %c0_16] : memref<16x128xf32, #tpu.memory_space<vmem>>, vector<16x128xf32>
    tpu.vector_store %arg6[%c0_15, %c0_16], %26 {strides = array<i32>} : memref<16x128xf32, #tpu.memory_space<vmem>>, vector<16x128xf32>,
    return
  }
  func.func @transform_0(%arg0: i32) -> (i32, i32) {
    %c0_i32 = arith.constant 0 : i32
    %c0_i32_0 = arith.constant 0 : i32
    return %arg0, %c0_i32 : i32, i32
  }
  func.func @transform_1(%arg0: i32) -> (i32, i32) {
    %c0_i32 = arith.constant 0 : i32
    %c0_i32_0 = arith.constant 0 : i32
    %c0_i32_1 = arith.constant 0 : i32
    return %c0_i32, %c0_i32_0 : i32, i32
  }
  func.func @transform_2(%arg0: i32) -> (i32, i32) {
    %c0_i32 = arith.constant 0 : i32
    %c0_i32_0 = arith.constant 0 : i32
    %c0_i32_1 = arith.constant 0 : i32
    return %c0_i32, %c0_i32_0 : i32, i32
  }
  func.func @transform_3(%arg0: i32) -> (i32, i32) {
    %c0_i32 = arith.constant 0 : i32
    %c0_i32_0 = arith.constant 0 : i32
    %c0_i32_1 = arith.constant 0 : i32
    return %c0_i32, %c0_i32_0 : i32, i32
  }
  func.func @transform_4(%arg0: i32) -> (i32, i32) {
    %c0_i32 = arith.constant 0 : i32
    %c0_i32_0 = arith.constant 0 : i32
    %c0_i32_1 = arith.constant 0 : i32
    return %c0_i32, %c0_i32_0 : i32, i32
  }
  func.func @transform_5(%arg0: i32) -> (i32, i32) {
    %c0_i32 = arith.constant 0 : i32
    %c0_i32_0 = arith.constant 0 : i32
    return %arg0, %c0_i32 : i32, i32
  }
}

</mosaic_0001>

<llo_original>
// kernel: tpu_custom_call.1
$region0: #{tpu_custom_call.1}
  #allocation0 [shape = 'u32[]', space=smem, size = 0x4, offset = 0x4, fixed_abs, tag = 'smem constant byte address 0x4 - core index']
  #allocation1 [shape = 'u32[144,128]{1,0:T(1,128)}', space=vmem, size = 0x12000, scoped, tag = 'internal scratch']
  %s0 = inlined_call_operand.hbm [shape: f32[16,128], index: 0, kind: input, shape index: {}]
  %s1 = inlined_call_operand.hbm [shape: bf16[128,128], index: 1, kind: input, shape index: {}]
  %s2 = inlined_call_operand.vmem [shape: f32[1,128], index: 2, kind: input, shape index: {}]
  %s3 = inlined_call_operand.hbm [shape: bf16[128,128], index: 3, kind: input, shape index: {}]
  %s4 = inlined_call_operand.vmem [shape: f32[1,128], index: 4, kind: input, shape index: {}]
  %s5 = inlined_call_operand.hbm [shape: f32[16,128], index: 5, kind: output, shape index: {}]
  %s6 = sld [smem:[#allocation0]]
  $region42: #{tpu_custom_call.1} parent=0
    _
  %s8 = ssub.s32 1, %s6
  %s9 = scalar_select 0, %s8, %s6
  $region1: #{tpu_custom_call.1} parent=0
    #allocation2 [shape = 'u8[8192]{0}', space=vmem, size = 0x2000, scoped, tag = 'input window, operand 0, single buffered']
    #allocation3 [shape = 's32[1]{0}', space=sflag, size = 0x4, scoped, tag = 'scoped memory for tpu_custom_call.1']
    #allocation4 [shape = 's32[1]{0}', space=sflag, size = 0x4, scoped, tag = 'scoped memory for tpu_custom_call.1']
    #allocation5 [shape = 'u8[32768]{0}', space=vmem, size = 0x8000, scoped, tag = 'input window, operand 1, single buffered']
    #allocation6 [shape = 's32[1]{0}', space=sflag, size = 0x4, scoped, tag = 'scoped memory for tpu_custom_call.1']
    #allocation7 [shape = 'u8[32768]{0}', space=vmem, size = 0x8000, scoped, tag = 'input window, operand 3, single buffered']
    #allocation8 [shape = 'u8[8192]{0}', space=vmem, size = 0x2000, scoped, tag = 'output window, operand 0, single buffered']
    %10 = vsyncpa [#allocation3], 0
    %11 = vsyncpa [#allocation6], 0
    %12 = vsyncpa [#allocation4], 0
    // Predicated region
    $region2: #{tpu_custom_call.1} parent=1 // pred_check
      _
    $region3: #{tpu_custom_call.1} parent=1 // pred_check_branch
      %14 = sbr.rel (0) target = $region5
    $region4: #{tpu_custom_call.1} parent=1 // pred_region
      %s16 = ssub.s32 256, 256
      %17 = vsyncadd [#allocation3], %s16
      %s18 = sshll.u32 [#allocation2], 4
      %s19 = int_to_ptr.vmem [resolvable:$true] %s18
      %24 = dma.hbm_to_vmem [thread:$0]  %s0, 256, %s19, [#allocation3], 128, 128, 8
    $region5: #{tpu_custom_call.1} parent=1 // pred_fallthru
      _
    // Predicated region
    $region6: #{tpu_custom_call.1} parent=1 // pred_check
      _
    $region7: #{tpu_custom_call.1} parent=1 // pred_check_branch
      %26 = sbr.rel (0) target = $region9
    $region8: #{tpu_custom_call.1} parent=1 // pred_region
      %s28 = ssub.s32 1024, 1024
      %29 = vsyncadd [#allocation6], %s28
      %s30 = sshll.u32 [#allocation5], 4
      %s31 = int_to_ptr.vmem [resolvable:$true] %s30
      %36 = dma.hbm_to_vmem [thread:$0]  %s1, 1024, %s31, [#allocation6], 64, 64, 4
    $region9: #{tpu_custom_call.1} parent=1 // pred_fallthru
      _
    // Predicated region
    $region10: #{tpu_custom_call.1} parent=1 // pred_check
      _
    $region11: #{tpu_custom_call.1} parent=1 // pred_check_branch
      %38 = sbr.rel (0) target = $region13
    $region12: #{tpu_custom_call.1} parent=1 // pred_region
      _
    $region13: #{tpu_custom_call.1} parent=1 // pred_fallthru
      _
    // Predicated region
    $region14: #{tpu_custom_call.1} parent=1 // pred_check
      _
    $region15: #{tpu_custom_call.1} parent=1 // pred_check_branch
      %40 = sbr.rel (0) target = $region17
    $region16: #{tpu_custom_call.1} parent=1 // pred_region
      %s42 = ssub.s32 1024, 1024
      %43 = vsyncadd [#allocation6], %s42
      %s44 = sshll.u32 [#allocation7], 4
      %s45 = int_to_ptr.vmem [resolvable:$true] %s44
      %50 = dma.hbm_to_vmem [thread:$0]  %s3, 1024, %s45, [#allocation6], 64, 64, 4
    $region17: #{tpu_custom_call.1} parent=1 // pred_fallthru
      _
    // Predicated region
    $region18: #{tpu_custom_call.1} parent=1 // pred_check
      _
    $region19: #{tpu_custom_call.1} parent=1 // pred_check_branch
      %52 = sbr.rel (0) target = $region21
    $region20: #{tpu_custom_call.1} parent=1 // pred_region
      _
    $region21: #{tpu_custom_call.1} parent=1 // pred_fallthru
      _
    // Predicated region
    $region22: #{tpu_custom_call.1} parent=1 // pred_check
      _
    $region23: #{tpu_custom_call.1} parent=1 // pred_check_branch
      %54 = sbr.rel (0) target = $region25
    $region24: #{tpu_custom_call.1} parent=1 // pred_region
      %55 = dma.done [#allocation3], 256
    $region25: #{tpu_custom_call.1} parent=1 // pred_fallthru
      _
    // Predicated region
    $region26: #{tpu_custom_call.1} parent=1 // pred_check
      _
    $region27: #{tpu_custom_call.1} parent=1 // pred_check_branch
      %57 = sbr.rel (0) target = $region29
    $region28: #{tpu_custom_call.1} parent=1 // pred_region
      %58 = dma.done [#allocation6], 1024
    $region29: #{tpu_custom_call.1} parent=1 // pred_fallthru
      _
    // Predicated region
    $region30: #{tpu_custom_call.1} parent=1 // pred_check
      _
    $region31: #{tpu_custom_call.1} parent=1 // pred_check_branch
      %60 = sbr.rel (0) target = $region33
    $region32: #{tpu_custom_call.1} parent=1 // pred_region
      %61 = dma.done [#allocation6], 1024
    $region33: #{tpu_custom_call.1} parent=1 // pred_fallthru
      _
    %v63 = vld [vmem:[#allocation2] sm:$0xff]
    %v64 = vld [vmem:[#allocation2 + $0x8] sm:$0xff]
    %v65 = vpack.c.bf16 %v64, %v63
    %v66 = vld [vmem:[#allocation5] sm:$0xf]
    %v67 = vld [vmem:[#allocation5 + $0x4] sm:$0xf]
    %v68 = vld [vmem:[#allocation5 + $0x8] sm:$0xf]
    %v69 = vld [vmem:[#allocation5 + $0xc] sm:$0xf]
    %v70 = vld [vmem:[#allocation5 + $0x10] sm:$0xf]
    %v71 = vld [vmem:[#allocation5 + $0x14] sm:$0xf]
    %v72 = vld [vmem:[#allocation5 + $0x18] sm:$0xf]
    %v73 = vld [vmem:[#allocation5 + $0x1c] sm:$0xf]
    %v74 = vld [vmem:[#allocation5 + $0x20] sm:$0xf]
    %v75 = vld [vmem:[#allocation5 + $0x24] sm:$0xf]
    %v76 = vld [vmem:[#allocation5 + $0x28] sm:$0xf]
    %v77 = vld [vmem:[#allocation5 + $0x2c] sm:$0xf]
    %v78 = vld [vmem:[#allocation5 + $0x30] sm:$0xf]
    %v79 = vld [vmem:[#allocation5 + $0x34] sm:$0xf]
    %v80 = vld [vmem:[#allocation5 + $0x38] sm:$0xf]
    %v81 = vld [vmem:[#allocation5 + $0x3c] sm:$0xf]
    %v82 = vld [vmem:[%s2] sm:$0x1]
    %v84 = vlaneseq
    %v85 = vshrl.u32 %v84, 7
    %v86 = vsub.s32 0, %v85
    %v87 = vrot.slane %v82, %v86
    %v105 = vunpack.c.l.b16 %v66
    %v106 = vunpack.c.l.b16 %v67
    %v107 = vunpack.c.l.b16 %v68
    %v108 = vunpack.c.l.b16 %v69
    %v109 = vunpack.c.l.b16 %v70
    %v110 = vunpack.c.l.b16 %v71
    %v111 = vunpack.c.l.b16 %v72
    %v112 = vunpack.c.l.b16 %v73
    %v113 = vunpack.c.l.b16 %v74
    %v114 = vunpack.c.l.b16 %v75
    %v115 = vunpack.c.l.b16 %v76
    %v116 = vunpack.c.l.b16 %v77
    %v117 = vunpack.c.l.b16 %v78
    %v118 = vunpack.c.l.b16 %v79
    %v119 = vunpack.c.l.b16 %v80
    %v120 = vunpack.c.l.b16 %v81
    %v121 = vpack.c.b16 %v106, %v105
    %v122 = vpack.c.b16 %v108, %v107
    %v123 = vpack.c.b16 %v110, %v109
    %v124 = vpack.c.b16 %v112, %v111
    %v125 = vpack.c.b16 %v114, %v113
    %v126 = vpack.c.b16 %v116, %v115
    %v127 = vpack.c.b16 %v118, %v117
    %v128 = vpack.c.b16 %v120, %v119
    %137 = vmatprep.subr.bf16.mxu0 0
    %138 = vmatpush1.bf16.msra.mxu0 %v121
    %139 = vmatprep.subr.bf16.mxu0 0
    %140 = vmatpush1.bf16.msra.mxu0 %v122
    %141 = vmatprep.subr.bf16.mxu0 0
    %142 = vmatpush1.bf16.msra.mxu0 %v123
    %143 = vmatprep.subr.bf16.mxu0 0
    %144 = vmatpush1.bf16.msra.mxu0 %v124
    %145 = vmatprep.subr.bf16.mxu0 0
    %146 = vmatpush1.bf16.msra.mxu0 %v125
    %147 = vmatprep.subr.bf16.mxu0 0
    %148 = vmatpush1.bf16.msra.mxu0 %v126
    %149 = vmatprep.subr.bf16.mxu0 0
    %150 = vmatpush1.bf16.msra.mxu0 %v127
    %151 = vmatprep.subr.bf16.mxu0 0
    %152 = vmatpush1.bf16.msra.mxu0 %v128
    %153 = vmatprep.subr.bf16.mxu0 0
    %154 = vmatpush1.bf16.msra.mxu0 0
    %155 = vmatprep.subr.bf16.mxu0 0
    %156 = vmatpush1.bf16.msra.mxu0 0
    %157 = vmatprep.subr.bf16.mxu0 0
    %158 = vmatpush1.bf16.msra.mxu0 0
    %159 = vmatprep.subr.bf16.mxu0 0
    %160 = vmatpush1.bf16.msra.mxu0 0
    %161 = vmatprep.subr.bf16.mxu0 0
    %162 = vmatpush1.bf16.msra.mxu0 0
    %163 = vmatprep.subr.bf16.mxu0 0
    %164 = vmatpush1.bf16.msra.mxu0 0
    %165 = vmatprep.subr.bf16.mxu0 0
    %166 = vmatpush1.bf16.msra.mxu0 0
    %167 = vmatprep.subr.bf16.mxu0 0
    %168 = vmatpush1.bf16.msra.mxu0 0
    %169 = vmatprep.mubr.bf16.mxu0 0
    %170 = vmatmul.mubr.bf16.gmra.mrb[0].mxu0 %v65
    %v171 = vpop.f32.mrb[0].mxu0
    %v172 = vadd.f32 %v87, %v171
    %v173 = vpop.f32.mrb[0].mxu0
    %v174 = vpop.f32.mrb[0].mxu0
    %v175 = vadd.f32 %v87, %v174
    %v176 = vpop.f32.mrb[0].mxu0
    %177 = vdwg.mxu0
    %v178 = vmul.f32 %v172, %v172
    %v179 = vmul.f32 %v175, %v175
    %v180 = vmul.f32 %v172, 0.5
    %v181 = vmul.f32 %v175, 0.5
    %v182 = vmul.f32 %v178, 0.035677407
    %v183 = vmul.f32 %v179, 0.035677407
    %v184 = vadd.f32 %v182, 0.7978846
    %v185 = vadd.f32 %v183, 0.7978846
    %v186 = vmul.f32 %v172, %v184
    %v187 = vmul.f32 %v175, %v185
    %v188 = vtanh.pop %v186
    %v189 = vtanh.pop %v187
    %v190 = vadd.f32 %v188, 1.0
    %v191 = vadd.f32 %v189, 1.0
    %v192 = vmul.f32 %v180, %v190
    %v193 = vmul.f32 %v181, %v191
    %v194 = vpack.c.bf16 %v193, %v192
    %v195 = vld [vmem:[#allocation7] sm:$0xf]
    %v196 = vld [vmem:[#allocation7 + $0x4] sm:$0xf]
    %v197 = vld [vmem:[#allocation7 + $0x8] sm:$0xf]
    %v198 = vld [vmem:[#allocation7 + $0xc] sm:$0xf]
    %v199 = vld [vmem:[#allocation7 + $0x10] sm:$0xf]
    %v200 = vld [vmem:[#allocation7 + $0x14] sm:$0xf]
    %v201 = vld [vmem:[#allocation7 + $0x18] sm:$0xf]
    %v202 = vld [vmem:[#allocation7 + $0x1c] sm:$0xf]
    %v203 = vld [vmem:[#allocation7 + $0x20] sm:$0xf]
    %v204 = vld [vmem:[#allocation7 + $0x24] sm:$0xf]
    %v205 = vld [vmem:[#allocation7 + $0x28] sm:$0xf]
    %v206 = vld [vmem:[#allocation7 + $0x2c] sm:$0xf]
    %v207 = vld [vmem:[#allocation7 + $0x30] sm:$0xf]
    %v208 = vld [vmem:[#allocation7 + $0x34] sm:$0xf]
    %v209 = vld [vmem:[#allocation7 + $0x38] sm:$0xf]
    %v210 = vld [vmem:[#allocation7 + $0x3c] sm:$0xf]
    %v211 = vld [vmem:[%s4] sm:$0x1]
    %v213 = vlaneseq
    %v214 = vshrl.u32 %v213, 7
    %v215 = vsub.s32 0, %v214
    %v216 = vrot.slane %v211, %v215
    %v234 = vunpack.c.l.b16 %v195
    %v235 = vunpack.c.l.b16 %v196
    %v236 = vunpack.c.l.b16 %v197
    %v237 = vunpack.c.l.b16 %v198
    %v238 = vunpack.c.l.b16 %v199
    %v239 = vunpack.c.l.b16 %v200
    %v240 = vunpack.c.l.b16 %v201
    %v241 = vunpack.c.l.b16 %v202
    %v242 = vunpack.c.l.b16 %v203
    %v243 = vunpack.c.l.b16 %v204
    %v244 = vunpack.c.l.b16 %v205
    %v245 = vunpack.c.l.b16 %v206
    %v246 = vunpack.c.l.b16 %v207
    %v247 = vunpack.c.l.b16 %v208
    %v248 = vunpack.c.l.b16 %v209
    %v249 = vunpack.c.l.b16 %v210
    %v250 = vpack.c.b16 %v235, %v234
    %v251 = vpack.c.b16 %v237, %v236
    %v252 = vpack.c.b16 %v239, %v238
    %v253 = vpack.c.b16 %v241, %v240
    %v254 = vpack.c.b16 %v243, %v242
    %v255 = vpack.c.b16 %v245, %v244
    %v256 = vpack.c.b16 %v247, %v246
    %v257 = vpack.c.b16 %v249, %v248
    %266 = vmatprep.subr.bf16.mxu0 0
    %267 = vmatpush1.bf16.msra.mxu0 %v250
    %268 = vmatprep.subr.bf16.mxu0 0
    %269 = vmatpush1.bf16.msra.mxu0 %v251
    %270 = vmatprep.subr.bf16.mxu0 0
    %271 = vmatpush1.bf16.msra.mxu0 %v252
    %272 = vmatprep.subr.bf16.mxu0 0
    %273 = vmatpush1.bf16.msra.mxu0 %v253
    %274 = vmatprep.subr.bf16.mxu0 0
    %275 = vmatpush1.bf16.msra.mxu0 %v254
    %276 = vmatprep.subr.bf16.mxu0 0
    %277 = vmatpush1.bf16.msra.mxu0 %v255
    %278 = vmatprep.subr.bf16.mxu0 0
    %279 = vmatpush1.bf16.msra.mxu0 %v256
    %280 = vmatprep.subr.bf16.mxu0 0
    %281 = vmatpush1.bf16.msra.mxu0 %v257
    %282 = vmatprep.subr.bf16.mxu0 0
    %283 = vmatpush1.bf16.msra.mxu0 0
    %284 = vmatprep.subr.bf16.mxu0 0
    %285 = vmatpush1.bf16.msra.mxu0 0
    %286 = vmatprep.subr.bf16.mxu0 0
    %287 = vmatpush1.bf16.msra.mxu0 0
    %288 = vmatprep.subr.bf16.mxu0 0
    %289 = vmatpush1.bf16.msra.mxu0 0
    %290 = vmatprep.subr.bf16.mxu0 0
    %291 = vmatpush1.bf16.msra.mxu0 0
    %292 = vmatprep.subr.bf16.mxu0 0
    %293 = vmatpush1.bf16.msra.mxu0 0
    %294 = vmatprep.subr.bf16.mxu0 0
    %295 = vmatpush1.bf16.msra.mxu0 0
    %296 = vmatprep.subr.bf16.mxu0 0
    %297 = vmatpush1.bf16.msra.mxu0 0
    %298 = vmatprep.mubr.bf16.mxu0 0
    %299 = vmatmul.mubr.bf16.gmra.mrb[0].mxu0 %v194
    %v300 = vpop.f32.mrb[0].mxu0
    %v301 = vadd.f32 %v216, %v300
    %v302 = vpop.f32.mrb[0].mxu0
    %v303 = vpop.f32.mrb[0].mxu0
    %v304 = vadd.f32 %v216, %v303
    %v305 = vpop.f32.mrb[0].mxu0
    %306 = vdwg.mxu0
    %307 = vst [vmem:[#allocation8] sm:$0xff] %v301
    %308 = vst [vmem:[#allocation8 + $0x8] sm:$0xff] %v304
    // Predicated region
    $region34: #{tpu_custom_call.1} parent=1 // pred_check
      _
    $region35: #{tpu_custom_call.1} parent=1 // pred_check_branch
      %310 = sbr.rel (0) target = $region37
    $region36: #{tpu_custom_call.1} parent=1 // pred_region
      %s312 = ssub.s32 256, 256
      %313 = vsyncadd [#allocation4], %s312
      %s314 = sshll.u32 [#allocation8], 4
      %s315 = int_to_ptr.vmem [resolvable:$true] %s314
      %320 = dma.vmem_to_hbm [thread:$0]  %s315, 256, %s5, [#allocation4], 128, 128, 8
    $region37: #{tpu_custom_call.1} parent=1 // pred_fallthru
      _
    // Predicated region
    $region38: #{tpu_custom_call.1} parent=1 // pred_check
      _
    $region39: #{tpu_custom_call.1} parent=1 // pred_check_branch
      %322 = sbr.rel (0) target = $region41
    $region40: #{tpu_custom_call.1} parent=1 // pred_region
      %323 = dma.done [#allocation4], 256
    $region41: #{tpu_custom_call.1} parent=1 // pred_fallthru
      _
    %324 = vsyncpa [#allocation3], 1
    %325 = vsyncpa [#allocation6], 1
    %326 = vsyncpa [#allocation4], 1

</llo_original>
